<compile_context>
chip_gen: v7x
topology: tpu7x:2x2x1
jax: 0.10.0
libtpu: 0.0.40
codegen_flags: <defaults>
</compile_context>

<pallas_src>
import functools

import jax
import jax.numpy as jnp
from jax.experimental import pallas as pl
from jax.experimental.pallas import tpu as pltpu


def _round_up(x, m):
    return ((x + m - 1) // m) * m


def conv_bn_relu_kernel(x_ref, w_ref, shift_ref, o_ref, acc_ref):
    # x_ref:     (tm, tk)      bf16 im2col patches tile
    # w_ref:     (tk, C2p)     bf16 conv weight tile (BN scale pre-folded)
    # shift_ref: (1,  C2p)     f32 folded BN shift (includes conv bias)
    # o_ref:     (tm, C2p)     f32 output tile
    # acc_ref:   (tm, C2p)     f32 accumulator scratch
    kk = pl.program_id(1)

    @pl.when(kk == 0)
    def _():
        acc_ref[...] = jnp.zeros_like(acc_ref)

    acc_ref[...] += jnp.dot(x_ref[...], w_ref[...],
                            preferred_element_type=jnp.float32)

    @pl.when(kk == pl.num_programs(1) - 1)
    def _():
        y = acc_ref[...] + shift_ref[...]
        o_ref[...] = jnp.maximum(y, 0.0).astype(o_ref.dtype)


def _im2col_nhwc(x_nhwc, k, s):
    """Extract k*k patches (plain-JAX glue). Returns (N*Ho*Wo, k*k*C), Ho, Wo."""
    N, H, W, C = x_nhwc.shape
    pad = k // 2
    xp = jnp.pad(x_nhwc, ((0, 0), (pad, pad), (pad, pad), (0, 0)))
    Ho = (H + 2 * pad - k) // s + 1
    Wo = (W + 2 * pad - k) // s + 1
    cols = []
    for di in range(k):
        for dj in range(k):
            cols.append(xp[:, di:di + s * Ho:s, dj:dj + s * Wo:s, :])
    patches = jnp.concatenate(cols, axis=-1)          # (N, Ho, Wo, k*k*C)
    return patches.reshape(N * Ho * Wo, k * k * C), Ho, Wo


@functools.partial(jax.jit, static_argnames=("k", "s"))
def conv_module_forward(x_nchw, conv_w, conv_b, bn_gamma, bn_beta,
                        bn_mean, bn_var, *, k, s, eps=1e-5):
    """Forward of Conv(c1, c2, k, s, act=True). x_nchw: (N, C1, H, W) f32."""
    N, C1, H, W = x_nchw.shape
    C2 = conv_w.shape[0]

    # NCHW -> NHWC, im2col (fused by XLA under jit).
    x_nhwc = jnp.transpose(x_nchw, (0, 2, 3, 1))
    patches, Ho, Wo = _im2col_nhwc(x_nhwc, k, s)       # (M, K)
    M, K = patches.shape

    # Lane-dense padding targets.
    K_pad = _round_up(K, 128)                          # contraction dim
    C2_pad = _round_up(C2, 128)                        # output-lane dim

    # PyTorch weight (C2, C1, kh, kw) -> (kh, kw, C1, C2) -> (K, C2), matching patch order.
    w_mat = jnp.transpose(conv_w, (2, 3, 1, 0)).reshape(K, C2)

    # Fold BN (eval mode) + conv bias; scale goes into the weights, shift stays in-kernel.
    bn_scale = bn_gamma / jnp.sqrt(bn_var + eps)       # (C2,)
    bn_shift = bn_beta - bn_mean * bn_scale + conv_b * bn_scale
    w_mat = w_mat * bn_scale[None, :]

    # Zero-pad K and C2 (numerically exact).
    if K_pad != K:
        patches = jnp.pad(patches, ((0, 0), (0, K_pad - K)))
        w_mat = jnp.pad(w_mat, ((0, K_pad - K), (0, 0)))
    if C2_pad != C2:
        w_mat = jnp.pad(w_mat, ((0, 0), (0, C2_pad - C2)))
        bn_shift = jnp.pad(bn_shift, ((0, C2_pad - C2),))
    shift = bn_shift.reshape(1, C2_pad).astype(jnp.float32)

    # bf16 operands, f32 accumulation inside the kernel.
    patches = patches.astype(jnp.bfloat16)
    w_mat = w_mat.astype(jnp.bfloat16)

    # ---- tiling ------------------------------------------------------------
    tm = 512
    if M >= 256:
        # keep >= 2 M-tiles so both v7x TensorCores get work
        tm = min(tm, max(128, _round_up(pl.cdiv(M, 2), 128)))
    else:
        tm = min(tm, _round_up(M, 8))

    # tk must evenly divide K_pad (a ragged K block would contaminate valid rows).
    if K_pad <= 512:
        tk = K_pad
    elif K_pad % 512 == 0:
        tk = 512
    elif K_pad % 256 == 0:
        tk = 256
    else:
        tk = 128

    grid = (pl.cdiv(M, tm), K_pad // tk)

    # Explicit VMEM budget with headroom (double-buffered bf16 x/w, f32 out + acc).
    est = (2 * tm * tk * 2 + 2 * tk * C2_pad * 2 + 2 * 8 * C2_pad * 4
           + 2 * tm * C2_pad * 4 + tm * C2_pad * 4)
    vmem_limit = int(min(max(2 * est, 32 * 1024 * 1024), 64 * 1024 * 1024))

    out = pl.pallas_call(
        conv_bn_relu_kernel,
        out_shape=jax.ShapeDtypeStruct((M, C2_pad), jnp.float32),
        grid=grid,
        in_specs=[
            pl.BlockSpec((tm, tk), lambda i, kk: (i, kk)),
            pl.BlockSpec((tk, C2_pad), lambda i, kk: (kk, 0)),
            pl.BlockSpec((1, C2_pad), lambda i, kk: (0, 0)),
        ],
        out_specs=pl.BlockSpec((tm, C2_pad), lambda i, kk: (i, 0)),
        scratch_shapes=[pltpu.VMEM((tm, C2_pad), jnp.float32)],
        compiler_params=pltpu.CompilerParams(
            dimension_semantics=("parallel", "arbitrary"),
            vmem_limit_bytes=vmem_limit),
    )(patches, w_mat, shift)

    out = out[:, :C2].reshape(N, Ho, Wo, C2)           # NHWC, drop C2 padding
    return jnp.transpose(out, (0, 3, 1, 2))            # back to NCHW


def _reference(x_nchw, conv_w, conv_b, bn_gamma, bn_beta, bn_mean, bn_var,
               *, k, s, eps=1e-5):
    y = jax.lax.conv_general_dilated(
        x_nchw, conv_w, window_strides=(s, s),
        padding=[(k // 2, k // 2), (k // 2, k // 2)],
        dimension_numbers=("NCHW", "OIHW", "NCHW"))
    y = y + conv_b[None, :, None, None]
    scale = bn_gamma / jnp.sqrt(bn_var + eps)
    y = (y - bn_mean[None, :, None, None]) * scale[None, :, None, None] \
        + bn_beta[None, :, None, None]
    return jnp.maximum(y, 0.0)


if __name__ == "__main__":
    # Conv(c1=4, c2=8, k=3, s=1, act=True)
    N, C1, H, W = 2, 4, 16, 16
    C2, k, s = 8, 3, 1

    key = jax.random.PRNGKey(0)
    kx, kw, kb = jax.random.split(key, 3)
    x = jax.random.normal(kx, (N, C1, H, W), dtype=jnp.float32)
    conv_w = jax.random.normal(kw, (C2, C1, k, k), dtype=jnp.float32) * 0.1
    conv_b = jax.random.normal(kb, (C2,), dtype=jnp.float32) * 0.1
    bn_gamma = jnp.ones((C2,), jnp.float32)
    bn_beta = jnp.zeros((C2,), jnp.float32)
    bn_mean = jnp.zeros((C2,), jnp.float32)
    bn_var = jnp.ones((C2,), jnp.float32)

    out = conv_module_forward(x, conv_w, conv_b, bn_gamma, bn_beta,
                              bn_mean, bn_var, k=k, s=s)
    out = jax.block_until_ready(out)

    ref = _reference(x, conv_w, conv_b, bn_gamma, bn_beta, bn_mean, bn_var,
                     k=k, s=s)
    assert out.shape == (N, C2, H, W), out.shape
    # bf16 operands (f32 accumulation) -> loosened tolerance vs the f32 reference.
    assert jnp.allclose(out, ref, atol=3e-2, rtol=3e-2), \
        float(jnp.max(jnp.abs(out - ref)))
    print("KERNEL_OK")
</pallas_src>

<mosaic_0001>
module attributes {stable_mosaic.version = 11 : i64} {
  func.func @conv_bn_relu_kernel(%arg0: i32, %arg1: i32, %arg2: memref<256x128xbf16, #tpu.memory_space<vmem>>, %arg3: memref<128x128xbf16, #tpu.memory_space<vmem>>, %arg4: memref<1x128xf32, #tpu.memory_space<vmem>>, %arg5: memref<256x128xf32, #tpu.memory_space<vmem>>, %arg6: memref<256x128xf32, #tpu.memory_space<vmem>>) attributes {dimension_semantics = [#tpu.dimension_semantics<parallel>, #tpu.dimension_semantics<arbitrary>], iteration_bounds = array<i64: 2, 1>, scalar_prefetch = 0 : i64, scratch_operands = 1 : i64, tpu.core_type = #tpu.core_type<tc>, window_params = [{transform_indices = @transform_0, window_bounds = array<i64: 256, 128>}, {transform_indices = @transform_1, window_bounds = array<i64: 128, 128>}, {pipeline_mode = #tpu.pipeline_mode<synchronous>, transform_indices = @transform_2, window_bounds = array<i64: 1, 128>}, {transform_indices = @transform_3, window_bounds = array<i64: 256, 128>}]} {
    %c0_i32 = arith.constant 0 : i32
    %0 = arith.cmpi eq, %arg1, %c0_i32 : i32
    %1 = arith.extui %0 : i1 to i32
    %c0_i32_0 = arith.constant 0 : i32
    %2 = arith.cmpi ne, %1, %c0_i32_0 : i32
    scf.if %2 {
      %cst_10 = arith.constant 0.000000e+00 : f32
      %12 = vector.broadcast %cst_10 : f32 to vector<256x128xf32>
      %c0_11 = arith.constant 0 : index
      %c0_12 = arith.constant 0 : index
      %13 = vector.load %arg6[%c0_11, %c0_12] : memref<256x128xf32, #tpu.memory_space<vmem>>, vector<256x128xf32>
      tpu.vector_store %arg6[%c0_11, %c0_12], %12 {strides = array<i32>} : memref<256x128xf32, #tpu.memory_space<vmem>>, vector<256x128xf32>,
    } else {
    }
    %c0 = arith.constant 0 : index
    %c0_1 = arith.constant 0 : index
    %3 = vector.load %arg6[%c0, %c0_1] : memref<256x128xf32, #tpu.memory_space<vmem>>, vector<256x128xf32>
    %c0_2 = arith.constant 0 : index
    %c0_3 = arith.constant 0 : index
    %4 = vector.load %arg2[%c0_2, %c0_3] : memref<256x128xbf16, #tpu.memory_space<vmem>>, vector<256x128xbf16>
    %c0_4 = arith.constant 0 : index
    %c0_5 = arith.constant 0 : index
    %5 = vector.load %arg3[%c0_4, %c0_5] : memref<128x128xbf16, #tpu.memory_space<vmem>>, vector<128x128xbf16>
    %cst = arith.constant dense<0.000000e+00> : vector<256x128xf32>
    %6 = tpu.matmul %4, %5, %cst {dimension_numbers = #tpu.dot_dimension_numbers<[1], [0], [0], [1], [0, 0, 1, 1], [], []>} : vector<256x128xbf16>, vector<128x128xbf16>, vector<256x128xf32> -> vector<256x128xf32>
    %7 = arith.addf %3, %6 : vector<256x128xf32>
    %c0_6 = arith.constant 0 : index
    %c0_7 = arith.constant 0 : index
    %8 = vector.load %arg6[%c0_6, %c0_7] : memref<256x128xf32, #tpu.memory_space<vmem>>, vector<256x128xf32>
    tpu.vector_store %arg6[%c0_6, %c0_7], %7 {strides = array<i32>} : memref<256x128xf32, #tpu.memory_space<vmem>>, vector<256x128xf32>,
    %c0_i32_8 = arith.constant 0 : i32
    %9 = arith.cmpi eq, %arg1, %c0_i32_8 : i32
    %10 = arith.extui %9 : i1 to i32
    %c0_i32_9 = arith.constant 0 : i32
    %11 = arith.cmpi ne, %10, %c0_i32_9 : i32
    scf.if %11 {
      %c0_10 = arith.constant 0 : index
      %c0_11 = arith.constant 0 : index
      %12 = vector.load %arg6[%c0_10, %c0_11] : memref<256x128xf32, #tpu.memory_space<vmem>>, vector<256x128xf32>
      %c0_12 = arith.constant 0 : index
      %c0_13 = arith.constant 0 : index
      %13 = vector.load %arg4[%c0_12, %c0_13] : memref<1x128xf32, #tpu.memory_space<vmem>>, vector<1x128xf32>
      %14 = vector.broadcast %13 : vector<1x128xf32> to vector<256x128xf32>
      %15 = arith.addf %12, %14 : vector<256x128xf32>
      %cst_14 = arith.constant 0.000000e+00 : f32
      %16 = vector.broadcast %cst_14 : f32 to vector<256x128xf32>
      %17 = arith.maximumf %15, %16 : vector<256x128xf32>
      %c0_15 = arith.constant 0 : index
      %c0_16 = arith.constant 0 : index
      %18 = vector.load %arg5[%c0_15, %c0_16] : memref<256x128xf32, #tpu.memory_space<vmem>>, vector<256x128xf32>
      tpu.vector_store %arg5[%c0_15, %c0_16], %17 {strides = array<i32>} : memref<256x128xf32, #tpu.memory_space<vmem>>, vector<256x128xf32>,
    } else {
    }
    return
  }
  func.func @transform_0(%arg0: i32, %arg1: i32) -> (i32, i32) {
    %c0_i32 = arith.constant 0 : i32
    return %arg0, %arg1 : i32, i32
  }
  func.func @transform_1(%arg0: i32, %arg1: i32) -> (i32, i32) {
    %c0_i32 = arith.constant 0 : i32
    %c0_i32_0 = arith.constant 0 : i32
    return %arg1, %c0_i32 : i32, i32
  }
  func.func @transform_2(%arg0: i32, %arg1: i32) -> (i32, i32) {
    %c0_i32 = arith.constant 0 : i32
    %c0_i32_0 = arith.constant 0 : i32
    %c0_i32_1 = arith.constant 0 : i32
    return %c0_i32, %c0_i32_0 : i32, i32
  }
  func.func @transform_3(%arg0: i32, %arg1: i32) -> (i32, i32) {
    %c0_i32 = arith.constant 0 : i32
    %c0_i32_0 = arith.constant 0 : i32
    return %arg0, %c0_i32 : i32, i32
  }
}

</mosaic_0001>

<llo_original>
// kernel: conv_module_forward.1
$region0: #{conv_module_forward.1}
  #allocation0 [shape = 'u32[]', space=smem, size = 0x4, offset = 0x4, fixed_abs, tag = 'smem constant byte address 0x4 - core index']
  #allocation1 [shape = 'u32[144,128]{1,0:T(1,128)}', space=vmem, size = 0x12000, scoped, tag = 'internal scratch']
  #allocation2 [shape = 'f32[256,128]{1,0:T(8,128)}', space=vmem, size = 0x20000, scoped, tag = 'scratch operand']
  %s0 = inlined_call_operand.vmem [shape: bf16[512,128], index: 0, kind: input, shape index: {}]
  %s1 = inlined_call_operand.vmem [shape: bf16[128,128], index: 1, kind: input, shape index: {}]
  %s2 = inlined_call_operand.vmem [shape: f32[1,128], index: 2, kind: input, shape index: {}]
  %s3 = inlined_call_operand.vmem [shape: f32[512,128], index: 3, kind: output, shape index: {}]
  %s4 = sld [smem:[#allocation0]]
  $region53: #{conv_module_forward.1} parent=0
    _
  %s6 = ssub.s32 1, %s4
  %s7 = scalar_select 0, %s6, %s4
  loop: start=0, step=1, limit=4
  $region2: #{conv_module_forward.1} parent=0 // loop_pre_header
    _
  $region3: #{conv_module_forward.1} parent=0 // loop_header
    %s9 = sphi 0, %s13
    %p10 = scmp.ge.s32.totalorder %s9, 4
    %s16 = sphi 0, %s28
    %s17 = sphi 0, %s24
    %s18 = sphi 0, %s16
    %s19 = sphi 0, %s17
    %s20 = sphi 0, %s18
    %s21 = sphi 0, %s19
    %s33 = sphi 0, %s35
    %s36 = sphi 0, %s33
    %s37 = sphi 0, %s36
    %s53 = sphi 0, %s37
    %s59 = sphi 0, %s61
    %s62 = sphi 0, %s59
    %s63 = sphi 0, %s62
    %s79 = sphi 0, %s63
    %s83 = sphi 0, %s83
    %s85 = sphi 0, %s83
    %s86 = sphi 0, %s85
    %s100 = sphi 0, %s86
    %s106 = sphi 0, %s108
    %s109 = sphi 0, %s106
    %s110 = sphi 0, %s109
    %s126 = sphi 0, %s110
  $region4: #{conv_module_forward.1} parent=0 // loop_header_branch
    %12 = sbr.rel (%p10) target = $region8
  $region5: #{conv_module_forward.1} parent=0 // loop_body
    %s14 = ssub.s32 %s9, 1
    %s15 = ssub.s32 %s9, 2
    %s22 = sadd.s32 1, %s17
    %p23 = scmp.ge.s32.totalorder %s22, 1
    %s24 = scalar_select %p23, 0, %s22
    %s25 = sadd.s32 1, %s16
    %s26 = scalar_select %p23, %s25, %s16
    %p27 = scmp.ge.s32.totalorder %s26, 2
    %s28 = scalar_select %p27, 0, %s26
    %s29 = ssub.s32 %s16, %s28
    %s30 = ssub.s32 %s17, %s24
    %s31 = sor.u32 %s29, %s30
    %p32 = scmp.eq.s32.totalorder %s31, 0
    %s34 = sadd.s32 %s33, 1
    %s35 = scalar_select %p32, %s33, %s34
    %p38 = pneg %p32
    %p39 = scmp.eq.s32.totalorder %s9, 1
    %p40 = por %p38, %p39
    %p41 = scmp.ne.s32.totalorder %s33, %s36
    %p42 = scmp.eq.s32.totalorder %s9, 0
    %p43 = por %p41, %p42
    %p44 = scmp.ne.s32.totalorder %s33, %s36
    %p45 = scmp.eq.s32.totalorder %s14, 1
    %p46 = por %p44, %p45
    %p47 = scmp.ne.s32.totalorder %s36, %s37
    %p48 = scmp.eq.s32.totalorder %s14, 0
    %p49 = por %p47, %p48
    %p50 = scmp.ne.s32.totalorder %s36, %s37
    %p51 = scmp.eq.s32.totalorder %s15, 1
    %p52 = por %p50, %p51
    %p54 = scmp.ne.s32.totalorder %s37, %s53
    %p55 = scmp.eq.s32.totalorder %s15, 0
    %p56 = por %p54, %p55
    %s57 = ssub.s32 %s17, %s24
    %p58 = scmp.eq.s32.totalorder %s57, 0
    %s60 = sadd.s32 %s59, 1
    %s61 = scalar_select %p58, %s59, %s60
    %p64 = pneg %p58
    %p65 = scmp.eq.s32.totalorder %s9, 1
    %p66 = por %p64, %p65
    %p67 = scmp.ne.s32.totalorder %s59, %s62
    %p68 = scmp.eq.s32.totalorder %s9, 0
    %p69 = por %p67, %p68
    %p70 = scmp.ne.s32.totalorder %s59, %s62
    %p71 = scmp.eq.s32.totalorder %s14, 1
    %p72 = por %p70, %p71
    %p73 = scmp.ne.s32.totalorder %s62, %s63
    %p74 = scmp.eq.s32.totalorder %s14, 0
    %p75 = por %p73, %p74
    %p76 = scmp.ne.s32.totalorder %s62, %s63
    %p77 = scmp.eq.s32.totalorder %s15, 1
    %p78 = por %p76, %p77
    %p80 = scmp.ne.s32.totalorder %s63, %s79
    %p81 = scmp.eq.s32.totalorder %s15, 0
    %p82 = por %p80, %p81
    %s84 = sadd.s32 %s83, 1
    %p87 = scmp.eq.s32.totalorder %s9, 1
    %p88 = scmp.ne.s32.totalorder %s83, %s85
    %p89 = scmp.eq.s32.totalorder %s9, 0
    %p90 = por %p88, %p89
    %p91 = scmp.ne.s32.totalorder %s83, %s85
    %p92 = scmp.eq.s32.totalorder %s14, 1
    %p93 = por %p91, %p92
    %p94 = scmp.ne.s32.totalorder %s85, %s86
    %p95 = scmp.eq.s32.totalorder %s14, 0
    %p96 = por %p94, %p95
    %p97 = scmp.ne.s32.totalorder %s85, %s86
    %p98 = scmp.eq.s32.totalorder %s15, 1
    %p99 = por %p97, %p98
    %p101 = scmp.ne.s32.totalorder %s86, %s100
    %p102 = scmp.eq.s32.totalorder %s15, 0
    %p103 = por %p101, %p102
    %s104 = ssub.s32 %s16, %s28
    %p105 = scmp.eq.s32.totalorder %s104, 0
    %s107 = sadd.s32 %s106, 1
    %s108 = scalar_select %p105, %s106, %s107
    %p111 = pneg %p105
    %p112 = scmp.eq.s32.totalorder %s9, 1
    %p113 = por %p111, %p112
    %p114 = scmp.ne.s32.totalorder %s106, %s109
    %p115 = scmp.eq.s32.totalorder %s9, 0
    %p116 = por %p114, %p115
    %p117 = scmp.ne.s32.totalorder %s106, %s109
    %p118 = scmp.eq.s32.totalorder %s14, 1
    %p119 = por %p117, %p118
    %p120 = scmp.ne.s32.totalorder %s109, %s110
    %p121 = scmp.eq.s32.totalorder %s14, 0
    %p122 = por %p120, %p121
    %p123 = scmp.ne.s32.totalorder %s109, %s110
    %p124 = scmp.eq.s32.totalorder %s15, 1
    %p125 = por %p123, %p124
    %p127 = scmp.ne.s32.totalorder %s110, %s126
    %p128 = scmp.eq.s32.totalorder %s15, 0
    %p129 = por %p127, %p128
    %p130 = scmp.le.s32.totalorder 1, %s9
    %p131 = scmp.lt.s32.totalorder %s9, 3
    %p132 = pnand %p130, %p131
    %p133 = pneg %p132
    // Predicated region
    $region9: #{conv_module_forward.1} parent=5 // pred_check
      _
    $region10: #{conv_module_forward.1} parent=5 // pred_check_branch
      %135 = sbr.rel (%p132) target = $region12
    $region11: #{conv_module_forward.1} parent=5 // pred_region
      %s136 = ssub.s32 %s9, 1
      // Predicated region
      $region13: #{conv_module_forward.1} parent=11 // pred_check
        %p137 = pneg %p75
      $region14: #{conv_module_forward.1} parent=11 // pred_check_branch
        %139 = sbr.rel (%p137) target = $region16
      $region15: #{conv_module_forward.1} parent=11 // pred_region
        %s140 = smul.u32 16, %s19
        %p141 = scmp.lt.s32.totalorder %s140, 15
        %s142 = scalar_select %p141, %s140, 15
        %s143 = smul.addr %s142, 4
        %s144 = scalar_lea.vmem %s1, %s143
        %s145 = smul.u32 16, %s19
      $region16: #{conv_module_forward.1} parent=11 // pred_fallthru
        _
      // Predicated region
      $region17: #{conv_module_forward.1} parent=11 // pred_check
        %p146 = pneg %p96
      $region18: #{conv_module_forward.1} parent=11 // pred_check_branch
        %148 = sbr.rel (%p146) target = $region20
      $region19: #{conv_module_forward.1} parent=11 // pred_region
        _
      $region20: #{conv_module_forward.1} parent=11 // pred_fallthru
        _
    $region12: #{conv_module_forward.1} parent=5 // pred_fallthru
      _
    %p149 = scmp.lt.s32.totalorder %s9, 2
    // Predicated region
    $region21: #{conv_module_forward.1} parent=5 // pred_check
      %p150 = pneg %p149
    $region22: #{conv_module_forward.1} parent=5 // pred_check_branch
      %152 = sbr.rel (%p150) target = $region24
    $region23: #{conv_module_forward.1} parent=5 // pred_region
      // Predicated region
      $region25: #{conv_module_forward.1} parent=23 // pred_check
        %p153 = pneg %p43
      $region26: #{conv_module_forward.1} parent=23 // pred_check_branch
        %155 = sbr.rel (%p153) target = $region28
      $region27: #{conv_module_forward.1} parent=23 // pred_region
        %s156 = smul.u32 32, %s16
        %p157 = scmp.lt.s32.totalorder %s156, 63
        %s158 = scalar_select %p157, %s156, 63
        %p159 = scmp.lt.s32.totalorder %s17, 0
        %s160 = scalar_select %p159, %s17, 0
        %s161 = sadd.s32 %s160, %s158
        %s162 = smul.addr %s161, 4
        %s163 = scalar_lea.vmem %s0, %s162
        %s164 = smul.u32 32, %s16
      $region28: #{conv_module_forward.1} parent=23 // pred_fallthru
        _
    $region24: #{conv_module_forward.1} parent=5 // pred_fallthru
      _
    %p165 = scmp.le.s32.totalorder 1, %s9
    %p166 = scmp.lt.s32.totalorder %s9, 3
    %p167 = pnand %p165, %p166
    %p168 = pneg %p167
    // Predicated region
    $region29: #{conv_module_forward.1} parent=5 // pred_check
      _
    $region30: #{conv_module_forward.1} parent=5 // pred_check_branch
      %170 = sbr.rel (%p167) target = $region32
    $region31: #{conv_module_forward.1} parent=5 // pred_region
      %s171 = ssub.s32 %s9, 1
      %s172 = smul.u32 32, %s18
      %p173 = scmp.lt.s32.totalorder %s172, 63
      %s174 = scalar_select %p173, %s172, 63
      %p175 = scmp.lt.s32.totalorder %s19, 0
      %s176 = scalar_select %p175, %s19, 0
      %s177 = sadd.s32 %s176, %s174
      %s178 = smul.addr %s177, 4
      %s179 = scalar_lea.vmem %s0, %s178
      %p180 = pneg %p49
      %p181 = pneg %p46
      %s182 = smul.u32 16, %s19
      %p183 = scmp.lt.s32.totalorder %s182, 15
      %s184 = scalar_select %p183, %s182, 15
      %s185 = smul.addr %s184, 4
      %s186 = scalar_lea.vmem %s1, %s185
      %p187 = pneg %p75
      %p188 = pneg %p72
      %p189 = pneg %p96
      %p190 = pneg %p93
      %p191 = pneg %p122
      %p192 = pneg %p119
      %s193 = smul.u32 32, %s18
      %p194 = scmp.lt.s32.totalorder %s193, 63
      %s195 = scalar_select %p194, %s193, 63
      %s196 = smul.addr %s195, 8
      %s197 = scalar_lea.vmem %s3, %s196
      %s198 = smul.u32 32, %s18
      %p199 = scmp.lt.s32.totalorder %s198, 63
      %s200 = scalar_select %p199, %s198, 63
      %p201 = scmp.lt.s32.totalorder %s19, 0
      %s202 = scalar_select %p201, %s19, 0
      %s203 = sadd.s32 %s202, %s200
      %s204 = smul.addr %s203, 4
      %s205 = scalar_lea.vmem %s0, %s204
      %s206 = smul.u32 32, %s18
      %s207 = smul.u32 16, %s19
      %p208 = scmp.lt.s32.totalorder %s207, 15
      %s209 = scalar_select %p208, %s207, 15
      %s210 = smul.addr %s209, 4
      %s211 = scalar_lea.vmem %s1, %s210
      %s212 = smul.u32 16, %s19
      %s213 = smul.u32 32, %s18
      %p214 = scmp.lt.s32.totalorder %s213, 63
      %s215 = scalar_select %p214, %s213, 63
      %s216 = smul.addr %s215, 8
      %s217 = scalar_lea.vmem %s3, %s216
      %s218 = smul.u32 32, %s18
      %p220 = scmp.eq.s32.totalorder %s19, 0
      // Predicated region
      $region33: #{conv_module_forward.1} parent=31 // pred_check
        %p221 = pneg %p220
      $region34: #{conv_module_forward.1} parent=31 // pred_check_branch
        %223 = sbr.rel (%p221) target = $region36
      $region35: #{conv_module_forward.1} parent=31 // pred_region
        %224 = vst [vmem:[#allocation2] sm:$0xff] 0.0
        %225 = vst [vmem:[#allocation2 + $0x8] sm:$0xff] 0.0
        %226 = vst [vmem:[#allocation2 + $0x10] sm:$0xff] 0.0
        %227 = vst [vmem:[#allocation2 + $0x18] sm:$0xff] 0.0
        %228 = vst [vmem:[#allocation2 + $0x20] sm:$0xff] 0.0
        %229 = vst [vmem:[#allocation2 + $0x28] sm:$0xff] 0.0
        %230 = vst [vmem:[#allocation2 + $0x30] sm:$0xff] 0.0
        %231 = vst [vmem:[#allocation2 + $0x38] sm:$0xff] 0.0
        %232 = vst [vmem:[#allocation2 + $0x40] sm:$0xff] 0.0
        %233 = vst [vmem:[#allocation2 + $0x48] sm:$0xff] 0.0
        %234 = vst [vmem:[#allocation2 + $0x50] sm:$0xff] 0.0
        %235 = vst [vmem:[#allocation2 + $0x58] sm:$0xff] 0.0
        %236 = vst [vmem:[#allocation2 + $0x60] sm:$0xff] 0.0
        %237 = vst [vmem:[#allocation2 + $0x68] sm:$0xff] 0.0
        %238 = vst [vmem:[#allocation2 + $0x70] sm:$0xff] 0.0
        %239 = vst [vmem:[#allocation2 + $0x78] sm:$0xff] 0.0
        %240 = vst [vmem:[#allocation2 + $0x80] sm:$0xff] 0.0
        %241 = vst [vmem:[#allocation2 + $0x88] sm:$0xff] 0.0
        %242 = vst [vmem:[#allocation2 + $0x90] sm:$0xff] 0.0
        %243 = vst [vmem:[#allocation2 + $0x98] sm:$0xff] 0.0
        %244 = vst [vmem:[#allocation2 + $0xa0] sm:$0xff] 0.0
        %245 = vst [vmem:[#allocation2 + $0xa8] sm:$0xff] 0.0
        %246 = vst [vmem:[#allocation2 + $0xb0] sm:$0xff] 0.0
        %247 = vst [vmem:[#allocation2 + $0xb8] sm:$0xff] 0.0
        %248 = vst [vmem:[#allocation2 + $0xc0] sm:$0xff] 0.0
        %249 = vst [vmem:[#allocation2 + $0xc8] sm:$0xff] 0.0
        %250 = vst [vmem:[#allocation2 + $0xd0] sm:$0xff] 0.0
        %251 = vst [vmem:[#allocation2 + $0xd8] sm:$0xff] 0.0
        %252 = vst [vmem:[#allocation2 + $0xe0] sm:$0xff] 0.0
        %253 = vst [vmem:[#allocation2 + $0xe8] sm:$0xff] 0.0
        %254 = vst [vmem:[#allocation2 + $0xf0] sm:$0xff] 0.0
        %255 = vst [vmem:[#allocation2 + $0xf8] sm:$0xff] 0.0
      $region36: #{conv_module_forward.1} parent=31 // pred_fallthru
        _
      %v256 = vld [vmem:[#allocation2] sm:$0xff]
      %v257 = vld [vmem:[#allocation2 + $0x8] sm:$0xff]
      %v258 = vld [vmem:[#allocation2 + $0x10] sm:$0xff]
      %v259 = vld [vmem:[#allocation2 + $0x18] sm:$0xff]
      %v260 = vld [vmem:[#allocation2 + $0x20] sm:$0xff]
      %v261 = vld [vmem:[#allocation2 + $0x28] sm:$0xff]
      %v262 = vld [vmem:[#allocation2 + $0x30] sm:$0xff]
      %v263 = vld [vmem:[#allocation2 + $0x38] sm:$0xff]
      %v264 = vld [vmem:[#allocation2 + $0x40] sm:$0xff]
      %v265 = vld [vmem:[#allocation2 + $0x48] sm:$0xff]
      %v266 = vld [vmem:[#allocation2 + $0x50] sm:$0xff]
      %v267 = vld [vmem:[#allocation2 + $0x58] sm:$0xff]
      %v268 = vld [vmem:[#allocation2 + $0x60] sm:$0xff]
      %v269 = vld [vmem:[#allocation2 + $0x68] sm:$0xff]
      %v270 = vld [vmem:[#allocation2 + $0x70] sm:$0xff]
      %v271 = vld [vmem:[#allocation2 + $0x78] sm:$0xff]
      %v272 = vld [vmem:[#allocation2 + $0x80] sm:$0xff]
      %v273 = vld [vmem:[#allocation2 + $0x88] sm:$0xff]
      %v274 = vld [vmem:[#allocation2 + $0x90] sm:$0xff]
      %v275 = vld [vmem:[#allocation2 + $0x98] sm:$0xff]
      %v276 = vld [vmem:[#allocation2 + $0xa0] sm:$0xff]
      %v277 = vld [vmem:[#allocation2 + $0xa8] sm:$0xff]
      %v278 = vld [vmem:[#allocation2 + $0xb0] sm:$0xff]
      %v279 = vld [vmem:[#allocation2 + $0xb8] sm:$0xff]
      %v280 = vld [vmem:[#allocation2 + $0xc0] sm:$0xff]
      %v281 = vld [vmem:[#allocation2 + $0xc8] sm:$0xff]
      %v282 = vld [vmem:[#allocation2 + $0xd0] sm:$0xff]
      %v283 = vld [vmem:[#allocation2 + $0xd8] sm:$0xff]
      %v284 = vld [vmem:[#allocation2 + $0xe0] sm:$0xff]
      %v285 = vld [vmem:[#allocation2 + $0xe8] sm:$0xff]
      %v286 = vld [vmem:[#allocation2 + $0xf0] sm:$0xff]
      %v287 = vld [vmem:[#allocation2 + $0xf8] sm:$0xff]
      %v288 = vld [vmem:[%s205] sm:$0xf]
      %v289 = vld [vmem:[%s205 + $0x4] sm:$0xf]
      %v290 = vld [vmem:[%s205 + $0x8] sm:$0xf]
      %v291 = vld [vmem:[%s205 + $0xc] sm:$0xf]
      %v292 = vld [vmem:[%s205 + $0x10] sm:$0xf]
      %v293 = vld [vmem:[%s205 + $0x14] sm:$0xf]
      %v294 = vld [vmem:[%s205 + $0x18] sm:$0xf]
      %v295 = vld [vmem:[%s205 + $0x1c] sm:$0xf]
      %v296 = vld [vmem:[%s205 + $0x20] sm:$0xf]
      %v297 = vld [vmem:[%s205 + $0x24] sm:$0xf]
      %v298 = vld [vmem:[%s205 + $0x28] sm:$0xf]
      %v299 = vld [vmem:[%s205 + $0x2c] sm:$0xf]
      %v300 = vld [vmem:[%s205 + $0x30] sm:$0xf]
      %v301 = vld [vmem:[%s205 + $0x34] sm:$0xf]
      %v302 = vld [vmem:[%s205 + $0x38] sm:$0xf]
      %v303 = vld [vmem:[%s205 + $0x3c] sm:$0xf]
      %v304 = vld [vmem:[%s205 + $0x40] sm:$0xf]
      %v305 = vld [vmem:[%s205 + $0x44] sm:$0xf]
      %v306 = vld [vmem:[%s205 + $0x48] sm:$0xf]
      %v307 = vld [vmem:[%s205 + $0x4c] sm:$0xf]
      %v308 = vld [vmem:[%s205 + $0x50] sm:$0xf]
      %v309 = vld [vmem:[%s205 + $0x54] sm:$0xf]
      %v310 = vld [vmem:[%s205 + $0x58] sm:$0xf]
      %v311 = vld [vmem:[%s205 + $0x5c] sm:$0xf]
      %v312 = vld [vmem:[%s205 + $0x60] sm:$0xf]
      %v313 = vld [vmem:[%s205 + $0x64] sm:$0xf]
      %v314 = vld [vmem:[%s205 + $0x68] sm:$0xf]
      %v315 = vld [vmem:[%s205 + $0x6c] sm:$0xf]
      %v316 = vld [vmem:[%s205 + $0x70] sm:$0xf]
      %v317 = vld [vmem:[%s205 + $0x74] sm:$0xf]
      %v318 = vld [vmem:[%s205 + $0x78] sm:$0xf]
      %v319 = vld [vmem:[%s205 + $0x7c] sm:$0xf]
      %v320 = vld [vmem:[%s211] sm:$0xf]
      %v321 = vld [vmem:[%s211 + $0x4] sm:$0xf]
      %v322 = vld [vmem:[%s211 + $0x8] sm:$0xf]
      %v323 = vld [vmem:[%s211 + $0xc] sm:$0xf]
      %v324 = vld [vmem:[%s211 + $0x10] sm:$0xf]
      %v325 = vld [vmem:[%s211 + $0x14] sm:$0xf]
      %v326 = vld [vmem:[%s211 + $0x18] sm:$0xf]
      %v327 = vld [vmem:[%s211 + $0x1c] sm:$0xf]
      %v328 = vld [vmem:[%s211 + $0x20] sm:$0xf]
      %v329 = vld [vmem:[%s211 + $0x24] sm:$0xf]
      %v330 = vld [vmem:[%s211 + $0x28] sm:$0xf]
      %v331 = vld [vmem:[%s211 + $0x2c] sm:$0xf]
      %v332 = vld [vmem:[%s211 + $0x30] sm:$0xf]
      %v333 = vld [vmem:[%s211 + $0x34] sm:$0xf]
      %v334 = vld [vmem:[%s211 + $0x38] sm:$0xf]
      %v335 = vld [vmem:[%s211 + $0x3c] sm:$0xf]
      %v368 = vunpack.c.l.b16 %v288
      %v369 = vunpack.c.l.b16 %v289
      %v370 = vunpack.c.l.b16 %v290
      %v371 = vunpack.c.l.b16 %v291
      %v372 = vunpack.c.l.b16 %v292
      %v373 = vunpack.c.l.b16 %v293
      %v374 = vunpack.c.l.b16 %v294
      %v375 = vunpack.c.l.b16 %v295
      %v376 = vunpack.c.l.b16 %v296
      %v377 = vunpack.c.l.b16 %v297
      %v378 = vunpack.c.l.b16 %v298
      %v379 = vunpack.c.l.b16 %v299
      %v380 = vunpack.c.l.b16 %v300
      %v381 = vunpack.c.l.b16 %v301
      %v382 = vunpack.c.l.b16 %v302
      %v383 = vunpack.c.l.b16 %v303
      %v384 = vunpack.c.l.b16 %v304
      %v385 = vunpack.c.l.b16 %v305
      %v386 = vunpack.c.l.b16 %v306
      %v387 = vunpack.c.l.b16 %v307
      %v388 = vunpack.c.l.b16 %v308
      %v389 = vunpack.c.l.b16 %v309
      %v390 = vunpack.c.l.b16 %v310
      %v391 = vunpack.c.l.b16 %v311
      %v392 = vunpack.c.l.b16 %v312
      %v393 = vunpack.c.l.b16 %v313
      %v394 = vunpack.c.l.b16 %v314
      %v395 = vunpack.c.l.b16 %v315
      %v396 = vunpack.c.l.b16 %v316
      %v397 = vunpack.c.l.b16 %v317
      %v398 = vunpack.c.l.b16 %v318
      %v399 = vunpack.c.l.b16 %v319
      %v400 = vpack.c.b16 %v369, %v368
      %v401 = vpack.c.b16 %v371, %v370
      %v402 = vpack.c.b16 %v373, %v372
      %v403 = vpack.c.b16 %v375, %v374
      %v404 = vpack.c.b16 %v377, %v376
      %v405 = vpack.c.b16 %v379, %v378
      %v406 = vpack.c.b16 %v381, %v380
      %v407 = vpack.c.b16 %v383, %v382
      %v408 = vpack.c.b16 %v385, %v384
      %v409 = vpack.c.b16 %v387, %v386
      %v410 = vpack.c.b16 %v389, %v388
      %v411 = vpack.c.b16 %v391, %v390
      %v412 = vpack.c.b16 %v393, %v392
      %v413 = vpack.c.b16 %v395, %v394
      %v414 = vpack.c.b16 %v397, %v396
      %v415 = vpack.c.b16 %v399, %v398
      %v448 = vunpack.c.l.b16 %v320
      %v449 = vunpack.c.l.b16 %v321
      %v450 = vunpack.c.l.b16 %v322
      %v451 = vunpack.c.l.b16 %v323
      %v452 = vunpack.c.l.b16 %v324
      %v453 = vunpack.c.l.b16 %v325
      %v454 = vunpack.c.l.b16 %v326
      %v455 = vunpack.c.l.b16 %v327
      %v456 = vunpack.c.l.b16 %v328
      %v457 = vunpack.c.l.b16 %v329
      %v458 = vunpack.c.l.b16 %v330
      %v459 = vunpack.c.l.b16 %v331
      %v460 = vunpack.c.l.b16 %v332
      %v461 = vunpack.c.l.b16 %v333
      %v462 = vunpack.c.l.b16 %v334
      %v463 = vunpack.c.l.b16 %v335
      %v464 = vpack.c.b16 %v449, %v448
      %v465 = vpack.c.b16 %v451, %v450
      %v466 = vpack.c.b16 %v453, %v452
      %v467 = vpack.c.b16 %v455, %v454
      %v468 = vpack.c.b16 %v457, %v456
      %v469 = vpack.c.b16 %v459, %v458
      %v470 = vpack.c.b16 %v461, %v460
      %v471 = vpack.c.b16 %v463, %v462
      %480 = vmatprep.subr.bf16.mxu0 0
      %481 = vmatpush1.bf16.msra.mxu0 %v464
      %482 = vmatprep.subr.bf16.mxu0 0
      %483 = vmatpush1.bf16.msra.mxu0 %v465
      %484 = vmatprep.subr.bf16.mxu0 0
      %485 = vmatpush1.bf16.msra.mxu0 %v466
      %486 = vmatprep.subr.bf16.mxu0 0
      %487 = vmatpush1.bf16.msra.mxu0 %v467
      %488 = vmatprep.subr.bf16.mxu0 0
      %489 = vmatpush1.bf16.msra.mxu0 %v468
      %490 = vmatprep.subr.bf16.mxu0 0
      %491 = vmatpush1.bf16.msra.mxu0 %v469
      %492 = vmatprep.subr.bf16.mxu0 0
      %493 = vmatpush1.bf16.msra.mxu0 %v470
      %494 = vmatprep.subr.bf16.mxu0 0
      %495 = vmatpush1.bf16.msra.mxu0 %v471
      %496 = vmatprep.subr.bf16.mxu0 0
      %497 = vmatpush1.bf16.msra.mxu0 0
      %498 = vmatprep.subr.bf16.mxu0 0
      %499 = vmatpush1.bf16.msra.mxu0 0
      %500 = vmatprep.subr.bf16.mxu0 0
      %501 = vmatpush1.bf16.msra.mxu0 0
      %502 = vmatprep.subr.bf16.mxu0 0
      %503 = vmatpush1.bf16.msra.mxu0 0
      %504 = vmatprep.subr.bf16.mxu0 0
      %505 = vmatpush1.bf16.msra.mxu0 0
      %506 = vmatprep.subr.bf16.mxu0 0
      %507 = vmatpush1.bf16.msra.mxu0 0
      %508 = vmatprep.subr.bf16.mxu0 0
      %509 = vmatpush1.bf16.msra.mxu0 0
      %510 = vmatprep.subr.bf16.mxu0 0
      %511 = vmatpush1.bf16.msra.mxu0 0
      %512 = vmatprep.mubr.bf16.mxu0 0
      %513 = vmatmul.mubr.bf16.gmra.mrb[0].mxu0 %v400
      %v514 = vpop.f32.mrb[0].mxu0
      %v515 = vadd.f32 0.0, %v514
      %v516 = vpop.f32.mrb[0].mxu0
      %v517 = vpop.f32.mrb[0].mxu0
      %v518 = vadd.f32 0.0, %v517
      %v519 = vpop.f32.mrb[0].mxu0
      %520 = vmatprep.mubr.bf16.mxu0 0
      %521 = vmatmul.mubr.bf16.gmra.mrb[0].mxu0 %v401
      %v522 = vpop.f32.mrb[0].mxu0
      %v523 = vadd.f32 0.0, %v522
      %v524 = vpop.f32.mrb[0].mxu0
      %v525 = vpop.f32.mrb[0].mxu0
      %v526 = vadd.f32 0.0, %v525
      %v527 = vpop.f32.mrb[0].mxu0
      %528 = vmatprep.mubr.bf16.mxu0 0
      %529 = vmatmul.mubr.bf16.gmra.mrb[0].mxu0 %v402
      %v530 = vpop.f32.mrb[0].mxu0
      %v531 = vadd.f32 0.0, %v530
      %v532 = vpop.f32.mrb[0].mxu0
      %v533 = vpop.f32.mrb[0].mxu0
      %v534 = vadd.f32 0.0, %v533
      %v535 = vpop.f32.mrb[0].mxu0
      %536 = vmatprep.mubr.bf16.mxu0 0
      %537 = vmatmul.mubr.bf16.gmra.mrb[0].mxu0 %v403
      %v538 = vpop.f32.mrb[0].mxu0
      %v539 = vadd.f32 0.0, %v538
      %v540 = vpop.f32.mrb[0].mxu0
      %v541 = vpop.f32.mrb[0].mxu0
      %v542 = vadd.f32 0.0, %v541
      %v543 = vpop.f32.mrb[0].mxu0
      %544 = vmatprep.mubr.bf16.mxu0 0
      %545 = vmatmul.mubr.bf16.gmra.mrb[0].mxu0 %v404
      %v546 = vpop.f32.mrb[0].mxu0
      %v547 = vadd.f32 0.0, %v546
      %v548 = vpop.f32.mrb[0].mxu0
      %v549 = vpop.f32.mrb[0].mxu0
      %v550 = vadd.f32 0.0, %v549
      %v551 = vpop.f32.mrb[0].mxu0
      %552 = vmatprep.mubr.bf16.mxu0 0
      %553 = vmatmul.mubr.bf16.gmra.mrb[0].mxu0 %v405
      %v554 = vpop.f32.mrb[0].mxu0
      %v555 = vadd.f32 0.0, %v554
      %v556 = vpop.f32.mrb[0].mxu0
      %v557 = vpop.f32.mrb[0].mxu0
      %v558 = vadd.f32 0.0, %v557
      %v559 = vpop.f32.mrb[0].mxu0
      %560 = vmatprep.mubr.bf16.mxu0 0
      %561 = vmatmul.mubr.bf16.gmra.mrb[0].mxu0 %v406
      %v562 = vpop.f32.mrb[0].mxu0
      %v563 = vadd.f32 0.0, %v562
      %v564 = vpop.f32.mrb[0].mxu0
      %v565 = vpop.f32.mrb[0].mxu0
      %v566 = vadd.f32 0.0, %v565
      %v567 = vpop.f32.mrb[0].mxu0
      %568 = vmatprep.mubr.bf16.mxu0 0
      %569 = vmatmul.mubr.bf16.gmra.mrb[0].mxu0 %v407
      %v570 = vpop.f32.mrb[0].mxu0
      %v571 = vadd.f32 0.0, %v570
      %v572 = vpop.f32.mrb[0].mxu0
      %v573 = vpop.f32.mrb[0].mxu0
      %v574 = vadd.f32 0.0, %v573
      %v575 = vpop.f32.mrb[0].mxu0
      %576 = vmatprep.mubr.bf16.mxu0 0
      %577 = vmatmul.mubr.bf16.gmra.mrb[0].mxu0 %v408
      %v578 = vpop.f32.mrb[0].mxu0
      %v579 = vadd.f32 0.0, %v578
      %v580 = vpop.f32.mrb[0].mxu0
      %v581 = vpop.f32.mrb[0].mxu0
      %v582 = vadd.f32 0.0, %v581
      %v583 = vpop.f32.mrb[0].mxu0
      %584 = vmatprep.mubr.bf16.mxu0 0
      %585 = vmatmul.mubr.bf16.gmra.mrb[0].mxu0 %v409
      %v586 = vpop.f32.mrb[0].mxu0
      %v587 = vadd.f32 0.0, %v586
      %v588 = vpop.f32.mrb[0].mxu0
      %v589 = vpop.f32.mrb[0].mxu0
      %v590 = vadd.f32 0.0, %v589
      %v591 = vpop.f32.mrb[0].mxu0
      %592 = vmatprep.mubr.bf16.mxu0 0
      %593 = vmatmul.mubr.bf16.gmra.mrb[0].mxu0 %v410
      %v594 = vpop.f32.mrb[0].mxu0
      %v595 = vadd.f32 0.0, %v594
      %v596 = vpop.f32.mrb[0].mxu0
      %v597 = vpop.f32.mrb[0].mxu0
      %v598 = vadd.f32 0.0, %v597
      %v599 = vpop.f32.mrb[0].mxu0
      %600 = vmatprep.mubr.bf16.mxu0 0
      %601 = vmatmul.mubr.bf16.gmra.mrb[0].mxu0 %v411
      %v602 = vpop.f32.mrb[0].mxu0
      %v603 = vadd.f32 0.0, %v602
      %v604 = vpop.f32.mrb[0].mxu0
      %v605 = vpop.f32.mrb[0].mxu0
      %v606 = vadd.f32 0.0, %v605
      %v607 = vpop.f32.mrb[0].mxu0
      %608 = vmatprep.mubr.bf16.mxu0 0
      %609 = vmatmul.mubr.bf16.gmra.mrb[0].mxu0 %v412
      %v610 = vpop.f32.mrb[0].mxu0
      %v611 = vadd.f32 0.0, %v610
      %v612 = vpop.f32.mrb[0].mxu0
      %v613 = vpop.f32.mrb[0].mxu0
      %v614 = vadd.f32 0.0, %v613
      %v615 = vpop.f32.mrb[0].mxu0
      %616 = vmatprep.mubr.bf16.mxu0 0
      %617 = vmatmul.mubr.bf16.gmra.mrb[0].mxu0 %v413
      %v618 = vpop.f32.mrb[0].mxu0
      %v619 = vadd.f32 0.0, %v618
      %v620 = vpop.f32.mrb[0].mxu0
      %v621 = vpop.f32.mrb[0].mxu0
      %v622 = vadd.f32 0.0, %v621
      %v623 = vpop.f32.mrb[0].mxu0
      %624 = vmatprep.mubr.bf16.mxu0 0
      %625 = vmatmul.mubr.bf16.gmra.mrb[0].mxu0 %v414
      %v626 = vpop.f32.mrb[0].mxu0
      %v627 = vadd.f32 0.0, %v626
      %v628 = vpop.f32.mrb[0].mxu0
      %v629 = vpop.f32.mrb[0].mxu0
      %v630 = vadd.f32 0.0, %v629
      %v631 = vpop.f32.mrb[0].mxu0
      %632 = vmatprep.mubr.bf16.mxu0 0
      %633 = vmatmul.mubr.bf16.gmra.mrb[0].mxu0 %v415
      %v634 = vpop.f32.mrb[0].mxu0
      %v635 = vadd.f32 0.0, %v634
      %v636 = vpop.f32.mrb[0].mxu0
      %v637 = vpop.f32.mrb[0].mxu0
      %v638 = vadd.f32 0.0, %v637
      %v639 = vpop.f32.mrb[0].mxu0
      %640 = vdwg.mxu0
      %v641 = vadd.f32 %v256, %v515
      %v642 = vadd.f32 %v257, %v518
      %v643 = vadd.f32 %v258, %v523
      %v644 = vadd.f32 %v259, %v526
      %v645 = vadd.f32 %v260, %v531
      %v646 = vadd.f32 %v261, %v534
      %v647 = vadd.f32 %v262, %v539
      %v648 = vadd.f32 %v263, %v542
      %v649 = vadd.f32 %v264, %v547
      %v650 = vadd.f32 %v265, %v550
      %v651 = vadd.f32 %v266, %v555
      %v652 = vadd.f32 %v267, %v558
      %v653 = vadd.f32 %v268, %v563
      %v654 = vadd.f32 %v269, %v566
      %v655 = vadd.f32 %v270, %v571
      %v656 = vadd.f32 %v271, %v574
      %v657 = vadd.f32 %v272, %v579
      %v658 = vadd.f32 %v273, %v582
      %v659 = vadd.f32 %v274, %v587
      %v660 = vadd.f32 %v275, %v590
      %v661 = vadd.f32 %v276, %v595
      %v662 = vadd.f32 %v277, %v598
      %v663 = vadd.f32 %v278, %v603
      %v664 = vadd.f32 %v279, %v606
      %v665 = vadd.f32 %v280, %v611
      %v666 = vadd.f32 %v281, %v614
      %v667 = vadd.f32 %v282, %v619
      %v668 = vadd.f32 %v283, %v622
      %v669 = vadd.f32 %v284, %v627
      %v670 = vadd.f32 %v285, %v630
      %v671 = vadd.f32 %v286, %v635
      %v672 = vadd.f32 %v287, %v638
      %673 = vst [vmem:[#allocation2] sm:$0xff] %v641
      %674 = vst [vmem:[#allocation2 + $0x8] sm:$0xff] %v642
      %675 = vst [vmem:[#allocation2 + $0x10] sm:$0xff] %v643
      %676 = vst [vmem:[#allocation2 + $0x18] sm:$0xff] %v644
      %677 = vst [vmem:[#allocation2 + $0x20] sm:$0xff] %v645
      %678 = vst [vmem:[#allocation2 + $0x28] sm:$0xff] %v646
      %679 = vst [vmem:[#allocation2 + $0x30] sm:$0xff] %v647
      %680 = vst [vmem:[#allocation2 + $0x38] sm:$0xff] %v648
      %681 = vst [vmem:[#allocation2 + $0x40] sm:$0xff] %v649
      %682 = vst [vmem:[#allocation2 + $0x48] sm:$0xff] %v650
      %683 = vst [vmem:[#allocation2 + $0x50] sm:$0xff] %v651
      %684 = vst [vmem:[#allocation2 + $0x58] sm:$0xff] %v652
      %685 = vst [vmem:[#allocation2 + $0x60] sm:$0xff] %v653
      %686 = vst [vmem:[#allocation2 + $0x68] sm:$0xff] %v654
      %687 = vst [vmem:[#allocation2 + $0x70] sm:$0xff] %v655
      %688 = vst [vmem:[#allocation2 + $0x78] sm:$0xff] %v656
      %689 = vst [vmem:[#allocation2 + $0x80] sm:$0xff] %v657
      %690 = vst [vmem:[#allocation2 + $0x88] sm:$0xff] %v658
      %691 = vst [vmem:[#allocation2 + $0x90] sm:$0xff] %v659
      %692 = vst [vmem:[#allocation2 + $0x98] sm:$0xff] %v660
      %693 = vst [vmem:[#allocation2 + $0xa0] sm:$0xff] %v661
      %694 = vst [vmem:[#allocation2 + $0xa8] sm:$0xff] %v662
      %695 = vst [vmem:[#allocation2 + $0xb0] sm:$0xff] %v663
      %696 = vst [vmem:[#allocation2 + $0xb8] sm:$0xff] %v664
      %697 = vst [vmem:[#allocation2 + $0xc0] sm:$0xff] %v665
      %698 = vst [vmem:[#allocation2 + $0xc8] sm:$0xff] %v666
      %699 = vst [vmem:[#allocation2 + $0xd0] sm:$0xff] %v667
      %700 = vst [vmem:[#allocation2 + $0xd8] sm:$0xff] %v668
      %701 = vst [vmem:[#allocation2 + $0xe0] sm:$0xff] %v669
      %702 = vst [vmem:[#allocation2 + $0xe8] sm:$0xff] %v670
      %703 = vst [vmem:[#allocation2 + $0xf0] sm:$0xff] %v671
      %704 = vst [vmem:[#allocation2 + $0xf8] sm:$0xff] %v672
      // Predicated region
      $region37: #{conv_module_forward.1} parent=31 // pred_check
        %p705 = pneg %p220
      $region38: #{conv_module_forward.1} parent=31 // pred_check_branch
        %707 = sbr.rel (%p705) target = $region40
      $region39: #{conv_module_forward.1} parent=31 // pred_region
        %v708 = vld [vmem:[#allocation2] sm:$0xff]
        %v709 = vld [vmem:[#allocation2 + $0x8] sm:$0xff]
        %v710 = vld [vmem:[#allocation2 + $0x10] sm:$0xff]
        %v711 = vld [vmem:[#allocation2 + $0x18] sm:$0xff]
        %v712 = vld [vmem:[#allocation2 + $0x20] sm:$0xff]
        %v713 = vld [vmem:[#allocation2 + $0x28] sm:$0xff]
        %v714 = vld [vmem:[#allocation2 + $0x30] sm:$0xff]
        %v715 = vld [vmem:[#allocation2 + $0x38] sm:$0xff]
        %v716 = vld [vmem:[#allocation2 + $0x40] sm:$0xff]
        %v717 = vld [vmem:[#allocation2 + $0x48] sm:$0xff]
        %v718 = vld [vmem:[#allocation2 + $0x50] sm:$0xff]
        %v719 = vld [vmem:[#allocation2 + $0x58] sm:$0xff]
        %v720 = vld [vmem:[#allocation2 + $0x60] sm:$0xff]
        %v721 = vld [vmem:[#allocation2 + $0x68] sm:$0xff]
        %v722 = vld [vmem:[#allocation2 + $0x70] sm:$0xff]
        %v723 = vld [vmem:[#allocation2 + $0x78] sm:$0xff]
        %v724 = vld [vmem:[#allocation2 + $0x80] sm:$0xff]
        %v725 = vld [vmem:[#allocation2 + $0x88] sm:$0xff]
        %v726 = vld [vmem:[#allocation2 + $0x90] sm:$0xff]
        %v727 = vld [vmem:[#allocation2 + $0x98] sm:$0xff]
        %v728 = vld [vmem:[#allocation2 + $0xa0] sm:$0xff]
        %v729 = vld [vmem:[#allocation2 + $0xa8] sm:$0xff]
        %v730 = vld [vmem:[#allocation2 + $0xb0] sm:$0xff]
        %v731 = vld [vmem:[#allocation2 + $0xb8] sm:$0xff]
        %v732 = vld [vmem:[#allocation2 + $0xc0] sm:$0xff]
        %v733 = vld [vmem:[#allocation2 + $0xc8] sm:$0xff]
        %v734 = vld [vmem:[#allocation2 + $0xd0] sm:$0xff]
        %v735 = vld [vmem:[#allocation2 + $0xd8] sm:$0xff]
        %v736 = vld [vmem:[#allocation2 + $0xe0] sm:$0xff]
        %v737 = vld [vmem:[#allocation2 + $0xe8] sm:$0xff]
        %v738 = vld [vmem:[#allocation2 + $0xf0] sm:$0xff]
        %v739 = vld [vmem:[#allocation2 + $0xf8] sm:$0xff]
        %v740 = vld [vmem:[%s2] sm:$0x1]
        %v742 = vlaneseq
        %v743 = vshrl.u32 %v742, 7
        %v744 = vsub.s32 0, %v743
        %v745 = vrot.slane %v740, %v744
        %v747 = vadd.f32 %v708, %v745
        %v748 = vadd.f32 %v709, %v745
        %v749 = vadd.f32 %v710, %v745
        %v750 = vadd.f32 %v711, %v745
        %v751 = vadd.f32 %v712, %v745
        %v752 = vadd.f32 %v713, %v745
        %v753 = vadd.f32 %v714, %v745
        %v754 = vadd.f32 %v715, %v745
        %v755 = vadd.f32 %v716, %v745
        %v756 = vadd.f32 %v717, %v745
        %v757 = vadd.f32 %v718, %v745
        %v758 = vadd.f32 %v719, %v745
        %v759 = vadd.f32 %v720, %v745
        %v760 = vadd.f32 %v721, %v745
        %v761 = vadd.f32 %v722, %v745
        %v762 = vadd.f32 %v723, %v745
        %v763 = vadd.f32 %v724, %v745
        %v764 = vadd.f32 %v725, %v745
        %v765 = vadd.f32 %v726, %v745
        %v766 = vadd.f32 %v727, %v745
        %v767 = vadd.f32 %v728, %v745
        %v768 = vadd.f32 %v729, %v745
        %v769 = vadd.f32 %v730, %v745
        %v770 = vadd.f32 %v731, %v745
        %v771 = vadd.f32 %v732, %v745
        %v772 = vadd.f32 %v733, %v745
        %v773 = vadd.f32 %v734, %v745
        %v774 = vadd.f32 %v735, %v745
        %v775 = vadd.f32 %v736, %v745
        %v776 = vadd.f32 %v737, %v745
        %v777 = vadd.f32 %v738, %v745
        %v778 = vadd.f32 %v739, %v745
        %v779 = vmax.f32 %v747, 0.0
        %v780 = vmax.f32 %v748, 0.0
        %v781 = vmax.f32 %v749, 0.0
        %v782 = vmax.f32 %v750, 0.0
        %v783 = vmax.f32 %v751, 0.0
        %v784 = vmax.f32 %v752, 0.0
        %v785 = vmax.f32 %v753, 0.0
        %v786 = vmax.f32 %v754, 0.0
        %v787 = vmax.f32 %v755, 0.0
        %v788 = vmax.f32 %v756, 0.0
        %v789 = vmax.f32 %v757, 0.0
        %v790 = vmax.f32 %v758, 0.0
        %v791 = vmax.f32 %v759, 0.0
        %v792 = vmax.f32 %v760, 0.0
        %v793 = vmax.f32 %v761, 0.0
        %v794 = vmax.f32 %v762, 0.0
        %v795 = vmax.f32 %v763, 0.0
        %v796 = vmax.f32 %v764, 0.0
        %v797 = vmax.f32 %v765, 0.0
        %v798 = vmax.f32 %v766, 0.0
        %v799 = vmax.f32 %v767, 0.0
        %v800 = vmax.f32 %v768, 0.0
        %v801 = vmax.f32 %v769, 0.0
        %v802 = vmax.f32 %v770, 0.0
        %v803 = vmax.f32 %v771, 0.0
        %v804 = vmax.f32 %v772, 0.0
        %v805 = vmax.f32 %v773, 0.0
        %v806 = vmax.f32 %v774, 0.0
        %v807 = vmax.f32 %v775, 0.0
        %v808 = vmax.f32 %v776, 0.0
        %v809 = vmax.f32 %v777, 0.0
        %v810 = vmax.f32 %v778, 0.0
        %811 = vst [vmem:[%s217] sm:$0xff] %v779
        %812 = vst [vmem:[%s217 + $0x8] sm:$0xff] %v780
        %813 = vst [vmem:[%s217 + $0x10] sm:$0xff] %v781
        %814 = vst [vmem:[%s217 + $0x18] sm:$0xff] %v782
        %815 = vst [vmem:[%s217 + $0x20] sm:$0xff] %v783
        %816 = vst [vmem:[%s217 + $0x28] sm:$0xff] %v784
        %817 = vst [vmem:[%s217 + $0x30] sm:$0xff] %v785
        %818 = vst [vmem:[%s217 + $0x38] sm:$0xff] %v786
        %819 = vst [vmem:[%s217 + $0x40] sm:$0xff] %v787
        %820 = vst [vmem:[%s217 + $0x48] sm:$0xff] %v788
        %821 = vst [vmem:[%s217 + $0x50] sm:$0xff] %v789
        %822 = vst [vmem:[%s217 + $0x58] sm:$0xff] %v790
        %823 = vst [vmem:[%s217 + $0x60] sm:$0xff] %v791
        %824 = vst [vmem:[%s217 + $0x68] sm:$0xff] %v792
        %825 = vst [vmem:[%s217 + $0x70] sm:$0xff] %v793
        %826 = vst [vmem:[%s217 + $0x78] sm:$0xff] %v794
        %827 = vst [vmem:[%s217 + $0x80] sm:$0xff] %v795
        %828 = vst [vmem:[%s217 + $0x88] sm:$0xff] %v796
        %829 = vst [vmem:[%s217 + $0x90] sm:$0xff] %v797
        %830 = vst [vmem:[%s217 + $0x98] sm:$0xff] %v798
        %831 = vst [vmem:[%s217 + $0xa0] sm:$0xff] %v799
        %832 = vst [vmem:[%s217 + $0xa8] sm:$0xff] %v800
        %833 = vst [vmem:[%s217 + $0xb0] sm:$0xff] %v801
        %834 = vst [vmem:[%s217 + $0xb8] sm:$0xff] %v802
        %835 = vst [vmem:[%s217 + $0xc0] sm:$0xff] %v803
        %836 = vst [vmem:[%s217 + $0xc8] sm:$0xff] %v804
        %837 = vst [vmem:[%s217 + $0xd0] sm:$0xff] %v805
        %838 = vst [vmem:[%s217 + $0xd8] sm:$0xff] %v806
        %839 = vst [vmem:[%s217 + $0xe0] sm:$0xff] %v807
        %840 = vst [vmem:[%s217 + $0xe8] sm:$0xff] %v808
        %841 = vst [vmem:[%s217 + $0xf0] sm:$0xff] %v809
        %842 = vst [vmem:[%s217 + $0xf8] sm:$0xff] %v810
      $region40: #{conv_module_forward.1} parent=31 // pred_fallthru
        _
      %s843 = smul.u32 32, %s18
      %p844 = scmp.lt.s32.totalorder %s843, 63
      %s845 = scalar_select %p844, %s843, 63
      %s846 = smul.addr %s845, 8
      %s847 = scalar_lea.vmem %s3, %s846
      // Predicated region
      $region41: #{conv_module_forward.1} parent=31 // pred_check
        %p848 = pneg %p119
      $region42: #{conv_module_forward.1} parent=31 // pred_check_branch
        %850 = sbr.rel (%p848) target = $region44
      $region43: #{conv_module_forward.1} parent=31 // pred_region
        %s851 = smul.u32 32, %s18
      $region44: #{conv_module_forward.1} parent=31 // pred_fallthru
        _
    $region32: #{conv_module_forward.1} parent=5 // pred_fallthru
      _
    %p852 = scmp.le.s32.totalorder 2, %s9
    // Predicated region
    $region45: #{conv_module_forward.1} parent=5 // pred_check
      %p853 = pneg %p852
    $region46: #{conv_module_forward.1} parent=5 // pred_check_branch
      %855 = sbr.rel (%p853) target = $region48
    $region47: #{conv_module_forward.1} parent=5 // pred_region
      %s856 = ssub.s32 %s9, 2
      // Predicated region
      $region49: #{conv_module_forward.1} parent=47 // pred_check
        %p857 = pneg %p125
      $region50: #{conv_module_forward.1} parent=47 // pred_check_branch
        %859 = sbr.rel (%p857) target = $region52
      $region51: #{conv_module_forward.1} parent=47 // pred_region
        %s860 = smul.u32 32, %s20
        %p861 = scmp.lt.s32.totalorder %s860, 63
        %s862 = scalar_select %p861, %s860, 63
        %s863 = smul.addr %s862, 8
        %s864 = scalar_lea.vmem %s3, %s863
      $region52: #{conv_module_forward.1} parent=47 // pred_fallthru
        _
    $region48: #{conv_module_forward.1} parent=5 // pred_fallthru
      _
  $region6: #{conv_module_forward.1} parent=0 // loop_footer
    %s13 = sadd.s32 1, %s9
  $region7: #{conv_module_forward.1} parent=0 // loop_footer_branch
    %8 = sbr.rel target = $region3
  $region8: #{conv_module_forward.1} parent=0 // loop_exit
    _

</llo_original>
